<compile_context>
chip_gen: v5e
topology: v5e:2x2
jax: 0.10.0
libtpu: 0.0.40
codegen_flags: <defaults>
</compile_context>

<pallas_src>
import jax
import jax.numpy as jnp
from jax import lax
from jax.experimental import pallas as pl
from jax.experimental.pallas import tpu as pltpu

_EPS = 1e-5
_LANE = 128


def _round_up(n, m):
    return ((n + m - 1) // m) * m


def _generator_kernel(x_ref, w1_ref, w2_ref, w3_ref, vec_ref, o_ref):
    x = x_ref[...].astype(jnp.float32)
    inv_b = 1.0 / x_ref.shape[0]          # static batch size
    hdim = w2_ref.shape[1]                # true (unpadded) hidden width
    odim = w3_ref.shape[1]                # lane-padded output width

    # Packed per-feature vectors (single lane-dense slab).
    g1 = vec_ref[0:1, :hdim]
    be1 = vec_ref[1:2, :hdim]
    g2 = vec_ref[2:3, :hdim]
    be2 = vec_ref[3:4, :hdim]
    b3 = vec_ref[4:5, :odim]

    def bn_relu(h, g, be):
        # Two-pass batch stats (biased variance) -- numerically safe and
        # free here (XLU/EUP slots, kernel is overhead-bound anyway).
        mean = jnp.sum(h, axis=0, keepdims=True) * inv_b
        centered = h - mean
        var = jnp.sum(centered * centered, axis=0, keepdims=True) * inv_b
        scale = g * lax.rsqrt(var + _EPS)
        return jnp.maximum(centered * scale + be, 0.0)

    # Block 1: Linear (bias exactly cancelled by BN mean-sub) -> BN -> ReLU
    h = jnp.dot(x, w1_ref[...], preferred_element_type=jnp.float32)
    h = bn_relu(h, g1, be1)

    # Block 2: Linear (bias exactly cancelled by BN mean-sub) -> BN -> ReLU
    h = jnp.dot(h, w2_ref[...], preferred_element_type=jnp.float32)
    h = bn_relu(h, g2, be2)

    # Output Linear (bias kept).  Padded output columns: w3/b3 columns are 0
    # there, so the padded lanes store exact zeros.
    out = jnp.dot(h, w3_ref[...], preferred_element_type=jnp.float32) + b3
    o_ref[...] = out.astype(o_ref.dtype)


def pack_generator_params(params):
    """Pack params for the kernel.

    Only w3's output dim is zero-padded to a full 128-lane width (lane-dense
    output store).  w1/w2 are passed unpadded -- full-array BlockSpecs are
    exempt from the (8,128) rule and this keeps weight DMA minimal.
    All (1,F) per-feature vectors go into one (8, lanes) slab.
    """
    input_dim, hidden_dim = params["w1"].shape
    output_dim = params["w3"].shape[1]
    op = _round_up(output_dim, _LANE)
    vlanes = max(hidden_dim, op)

    w1 = params["w1"].astype(jnp.float32)
    w2 = params["w2"].astype(jnp.float32)
    w3p = jnp.zeros((hidden_dim, op), jnp.float32).at[:, :output_dim].set(
        params["w3"])

    vecs = jnp.zeros((8, vlanes), jnp.float32)
    vecs = vecs.at[0, :hidden_dim].set(params["g1"][0])
    vecs = vecs.at[1, :hidden_dim].set(params["be1"][0])
    vecs = vecs.at[2, :hidden_dim].set(params["g2"][0])
    vecs = vecs.at[3, :hidden_dim].set(params["be2"][0])
    vecs = vecs.at[4, :output_dim].set(params["b3"][0])
    # b1 / b2 intentionally not packed: exactly cancelled by training-mode BN.

    return w1, w2, w3p, vecs, output_dim


def generator_forward(x, w1, w2, w3p, vecs, output_dim):
    """x: (B, input_dim) f32.  Returns (B, output_dim) f32.

    NOTE: for throughput, batch many noise vectors into one call (M >= 128
    on v5e, >= 256 on v6e/v7x) -- the per-call floor and MXU occupancy
    dominate at tiny B.
    """
    B = x.shape[0]
    op = w3p.shape[1]
    args = (x, w1, w2, w3p, vecs)
    in_specs = [pl.BlockSpec(memory_space=pltpu.MemorySpace.VMEM) for _ in args]
    out_padded = pl.pallas_call(
        _generator_kernel,
        out_shape=jax.ShapeDtypeStruct((B, op), jnp.float32),
        in_specs=in_specs,
        out_specs=pl.BlockSpec(memory_space=pltpu.MemorySpace.VMEM),
    )(*args)
    # Keep the padded slab instead if the consumer tolerates it (saves one
    # tiny slice op per call in the many-small-calls regime).
    return out_padded[:, :output_dim]


def init_generator_params(key, input_dim, output_dim, hidden_dim):
    """Deterministic init mimicking nn.Linear's uniform(-1/sqrt(fan_in), ..)."""
    ks = jax.random.split(key, 6)

    def linear(kw, kb, fan_in, fan_out):
        bound = 1.0 / jnp.sqrt(float(fan_in))
        w = jax.random.uniform(kw, (fan_in, fan_out), jnp.float32, -bound, bound)
        b = jax.random.uniform(kb, (1, fan_out), jnp.float32, -bound, bound)
        return w, b

    w1, b1 = linear(ks[0], ks[1], input_dim, hidden_dim)
    w2, b2 = linear(ks[2], ks[3], hidden_dim, hidden_dim)
    w3, b3 = linear(ks[4], ks[5], hidden_dim, output_dim)
    return {
        "w1": w1, "b1": b1,
        "g1": jnp.ones((1, hidden_dim), jnp.float32),
        "be1": jnp.zeros((1, hidden_dim), jnp.float32),
        "w2": w2, "b2": b2,
        "g2": jnp.ones((1, hidden_dim), jnp.float32),
        "be2": jnp.zeros((1, hidden_dim), jnp.float32),
        "w3": w3, "b3": b3,
    }


def _reference_forward(x, p):
    """Plain-JAX reference matching PyTorch training-mode BatchNorm1d,
    using the original formulation (with b1/b2 biases, standard two-pass
    variance) to also verify the bias-cancellation identity."""
    def bn(h):
        mean = jnp.mean(h, axis=0, keepdims=True)
        var = jnp.mean((h - mean) ** 2, axis=0, keepdims=True)
        return (h - mean) / jnp.sqrt(var + _EPS)

    h = x @ p["w1"] + p["b1"]
    h = jnp.maximum(bn(h) * p["g1"] + p["be1"], 0.0)
    h = h @ p["w2"] + p["b2"]
    h = jnp.maximum(bn(h) * p["g2"] + p["be2"], 0.0)
    return h @ p["w3"] + p["b3"]


if __name__ == "__main__":
    input_dim, output_dim, hidden_dim = 16, 8, 32
    batch = 8

    key = jax.random.PRNGKey(0)
    kx, kp = jax.random.split(key)
    x = jax.random.normal(kx, (batch, input_dim), jnp.float32)
    params = init_generator_params(kp, input_dim, output_dim, hidden_dim)

    w1, w2, w3p, vecs, out_dim = pack_generator_params(params)

    out = generator_forward(x, w1, w2, w3p, vecs, out_dim)
    out = jax.block_until_ready(out)

    ref = _reference_forward(x, params)
    assert out.shape == (batch, output_dim)
    assert jnp.allclose(out, ref, atol=1e-4, rtol=1e-4), "mismatch vs JAX reference"

    print("KERNEL_OK")
</pallas_src>

<mosaic_0001>
module attributes {stable_mosaic.version = 11 : i64} {
  func.func @_generator_kernel(%arg0: memref<8x16xf32, #tpu.memory_space<vmem>>, %arg1: memref<16x32xf32, #tpu.memory_space<vmem>>, %arg2: memref<32x32xf32, #tpu.memory_space<vmem>>, %arg3: memref<32x128xf32, #tpu.memory_space<vmem>>, %arg4: memref<8x128xf32, #tpu.memory_space<vmem>>, %arg5: memref<8x128xf32, #tpu.memory_space<vmem>>) attributes {dimension_semantics = [], scalar_prefetch = 0 : i64, scratch_operands = 0 : i64, tpu.core_type = #tpu.core_type<tc>} {
    %c0 = arith.constant 0 : index
    %c0_0 = arith.constant 0 : index
    %0 = vector.load %arg0[%c0, %c0_0] : memref<8x16xf32, #tpu.memory_space<vmem>>, vector<8x16xf32>
    %c0_1 = arith.constant 0 : index
    %c0_2 = arith.constant 0 : index
    %1 = vector.load %arg4[%c0_1, %c0_2] : memref<8x128xf32, #tpu.memory_space<vmem>>, vector<1x32xf32>
    %c1 = arith.constant 1 : index
    %c0_3 = arith.constant 0 : index
    %2 = vector.load %arg4[%c1, %c0_3] : memref<8x128xf32, #tpu.memory_space<vmem>>, vector<1x32xf32>
    %c2 = arith.constant 2 : index
    %c0_4 = arith.constant 0 : index
    %3 = vector.load %arg4[%c2, %c0_4] : memref<8x128xf32, #tpu.memory_space<vmem>>, vector<1x32xf32>
    %c3 = arith.constant 3 : index
    %c0_5 = arith.constant 0 : index
    %4 = vector.load %arg4[%c3, %c0_5] : memref<8x128xf32, #tpu.memory_space<vmem>>, vector<1x32xf32>
    %c4 = arith.constant 4 : index
    %c0_6 = arith.constant 0 : index
    %5 = vector.load %arg4[%c4, %c0_6] : memref<8x128xf32, #tpu.memory_space<vmem>>, vector<1x128xf32>
    %c0_7 = arith.constant 0 : index
    %c0_8 = arith.constant 0 : index
    %6 = vector.load %arg1[%c0_7, %c0_8] : memref<16x32xf32, #tpu.memory_space<vmem>>, vector<16x32xf32>
    %cst = arith.constant dense<0.000000e+00> : vector<8x32xf32>
    %7 = tpu.matmul %0, %6, %cst {dimension_numbers = #tpu.dot_dimension_numbers<[1], [0], [0], [1], [0, 0, 1, 1], [], []>} : vector<8x16xf32>, vector<16x32xf32>, vector<8x32xf32> -> vector<8x32xf32>
    %cst_9 = arith.constant dense<0.000000e+00> : vector<32xf32>
    %8 = vector.multi_reduction <add>, %7, %cst_9 [0] : vector<8x32xf32> to vector<32xf32>
    %9 = vector.shape_cast %8 : vector<32xf32> to vector<1x32xf32>
    %cst_10 = arith.constant 1.250000e-01 : f32
    %10 = vector.broadcast %cst_10 : f32 to vector<1x32xf32>
    %11 = arith.mulf %9, %10 : vector<1x32xf32>
    %12 = vector.broadcast %11 : vector<1x32xf32> to vector<8x32xf32>
    %13 = arith.subf %7, %12 : vector<8x32xf32>
    %14 = arith.mulf %13, %13 : vector<8x32xf32>
    %cst_11 = arith.constant dense<0.000000e+00> : vector<32xf32>
    %15 = vector.multi_reduction <add>, %14, %cst_11 [0] : vector<8x32xf32> to vector<32xf32>
    %16 = vector.shape_cast %15 : vector<32xf32> to vector<1x32xf32>
    %cst_12 = arith.constant 1.250000e-01 : f32
    %17 = vector.broadcast %cst_12 : f32 to vector<1x32xf32>
    %18 = arith.mulf %16, %17 : vector<1x32xf32>
    %cst_13 = arith.constant 9.99999974E-6 : f32
    %19 = vector.broadcast %cst_13 : f32 to vector<1x32xf32>
    %20 = arith.addf %18, %19 : vector<1x32xf32>
    %21 = math.rsqrt %20 : vector<1x32xf32>
    %22 = arith.mulf %1, %21 : vector<1x32xf32>
    %23 = vector.broadcast %22 : vector<1x32xf32> to vector<8x32xf32>
    %24 = arith.mulf %13, %23 : vector<8x32xf32>
    %25 = vector.broadcast %2 : vector<1x32xf32> to vector<8x32xf32>
    %26 = arith.addf %24, %25 : vector<8x32xf32>
    %cst_14 = arith.constant 0.000000e+00 : f32
    %27 = vector.broadcast %cst_14 : f32 to vector<8x32xf32>
    %28 = arith.maximumf %26, %27 : vector<8x32xf32>
    %c0_15 = arith.constant 0 : index
    %c0_16 = arith.constant 0 : index
    %29 = vector.load %arg2[%c0_15, %c0_16] : memref<32x32xf32, #tpu.memory_space<vmem>>, vector<32x32xf32>
    %cst_17 = arith.constant dense<0.000000e+00> : vector<8x32xf32>
    %30 = tpu.matmul %28, %29, %cst_17 {dimension_numbers = #tpu.dot_dimension_numbers<[1], [0], [0], [1], [0, 0, 1, 1], [], []>} : vector<8x32xf32>, vector<32x32xf32>, vector<8x32xf32> -> vector<8x32xf32>
    %cst_18 = arith.constant dense<0.000000e+00> : vector<32xf32>
    %31 = vector.multi_reduction <add>, %30, %cst_18 [0] : vector<8x32xf32> to vector<32xf32>
    %32 = vector.shape_cast %31 : vector<32xf32> to vector<1x32xf32>
    %cst_19 = arith.constant 1.250000e-01 : f32
    %33 = vector.broadcast %cst_19 : f32 to vector<1x32xf32>
    %34 = arith.mulf %32, %33 : vector<1x32xf32>
    %35 = vector.broadcast %34 : vector<1x32xf32> to vector<8x32xf32>
    %36 = arith.subf %30, %35 : vector<8x32xf32>
    %37 = arith.mulf %36, %36 : vector<8x32xf32>
    %cst_20 = arith.constant dense<0.000000e+00> : vector<32xf32>
    %38 = vector.multi_reduction <add>, %37, %cst_20 [0] : vector<8x32xf32> to vector<32xf32>
    %39 = vector.shape_cast %38 : vector<32xf32> to vector<1x32xf32>
    %cst_21 = arith.constant 1.250000e-01 : f32
    %40 = vector.broadcast %cst_21 : f32 to vector<1x32xf32>
    %41 = arith.mulf %39, %40 : vector<1x32xf32>
    %cst_22 = arith.constant 9.99999974E-6 : f32
    %42 = vector.broadcast %cst_22 : f32 to vector<1x32xf32>
    %43 = arith.addf %41, %42 : vector<1x32xf32>
    %44 = math.rsqrt %43 : vector<1x32xf32>
    %45 = arith.mulf %3, %44 : vector<1x32xf32>
    %46 = vector.broadcast %45 : vector<1x32xf32> to vector<8x32xf32>
    %47 = arith.mulf %36, %46 : vector<8x32xf32>
    %48 = vector.broadcast %4 : vector<1x32xf32> to vector<8x32xf32>
    %49 = arith.addf %47, %48 : vector<8x32xf32>
    %cst_23 = arith.constant 0.000000e+00 : f32
    %50 = vector.broadcast %cst_23 : f32 to vector<8x32xf32>
    %51 = arith.maximumf %49, %50 : vector<8x32xf32>
    %c0_24 = arith.constant 0 : index
    %c0_25 = arith.constant 0 : index
    %52 = vector.load %arg3[%c0_24, %c0_25] : memref<32x128xf32, #tpu.memory_space<vmem>>, vector<32x128xf32>
    %cst_26 = arith.constant dense<0.000000e+00> : vector<8x128xf32>
    %53 = tpu.matmul %51, %52, %cst_26 {dimension_numbers = #tpu.dot_dimension_numbers<[1], [0], [0], [1], [0, 0, 1, 1], [], []>} : vector<8x32xf32>, vector<32x128xf32>, vector<8x128xf32> -> vector<8x128xf32>
    %54 = vector.broadcast %5 : vector<1x128xf32> to vector<8x128xf32>
    %55 = arith.addf %53, %54 : vector<8x128xf32>
    %c0_27 = arith.constant 0 : index
    %c0_28 = arith.constant 0 : index
    %56 = vector.load %arg5[%c0_27, %c0_28] : memref<8x128xf32, #tpu.memory_space<vmem>>, vector<8x128xf32>
    tpu.vector_store %arg5[%c0_27, %c0_28], %55 {strides = array<i32>} : memref<8x128xf32, #tpu.memory_space<vmem>>, vector<8x128xf32>,
    return
  }
}

</mosaic_0001>

<llo_original>
// kernel: tpu_custom_call.1
$region0: #{tpu_custom_call.1}
  #allocation0 [shape = 'u32[]', space=smem, size = 0x4, offset = 0x4, fixed_abs, tag = 'smem constant byte address 0x4 - core index']
  #allocation1 [shape = 'u32[72,128]{1,0:T(1,128)}', space=vmem, size = 0x9000, scoped, tag = 'internal scratch']
  %s0 = inlined_call_operand.hbm [shape: f32[8,16], index: 0, kind: input, shape index: {}]
  %s1 = inlined_call_operand.hbm [shape: f32[16,32], index: 1, kind: input, shape index: {}]
  %s2 = inlined_call_operand.hbm [shape: f32[32,32], index: 2, kind: input, shape index: {}]
  %s3 = inlined_call_operand.hbm [shape: f32[32,128], index: 3, kind: input, shape index: {}]
  %s4 = inlined_call_operand.hbm [shape: f32[8,128], index: 4, kind: input, shape index: {}]
  %s5 = inlined_call_operand.hbm [shape: f32[8,128], index: 5, kind: output, shape index: {}]
  %s6 = sld [smem:[#allocation0]]
  $region50: #{tpu_custom_call.1} parent=0
    _
  %s8 = ssub.s32 1, %s6
  %s9 = scalar_select 0, %s8, %s6
  $region1: #{tpu_custom_call.1} parent=0
    #allocation2 [shape = 'u8[4096]{0}', space=vmem, size = 0x1000, scoped, tag = 'input window, operand 0, single buffered']
    #allocation3 [shape = 's32[1]{0}', space=sflag, size = 0x4, scoped, tag = 'scoped memory for tpu_custom_call.1']
    #allocation4 [shape = 's32[1]{0}', space=sflag, size = 0x4, scoped, tag = 'scoped memory for tpu_custom_call.1']
    #allocation5 [shape = 'u8[8192]{0}', space=vmem, size = 0x2000, scoped, tag = 'input window, operand 1, single buffered']
    #allocation6 [shape = 's32[1]{0}', space=sflag, size = 0x4, scoped, tag = 'scoped memory for tpu_custom_call.1']
    #allocation7 [shape = 'u8[16384]{0}', space=vmem, size = 0x4000, scoped, tag = 'input window, operand 2, single buffered']
    #allocation8 [shape = 'u8[16384]{0}', space=vmem, size = 0x4000, scoped, tag = 'input window, operand 3, single buffered']
    #allocation9 [shape = 's32[1]{0}', space=sflag, size = 0x4, scoped, tag = 'scoped memory for tpu_custom_call.1']
    #allocation10 [shape = 'u8[4096]{0}', space=vmem, size = 0x1000, scoped, tag = 'input window, operand 4, single buffered']
    #allocation11 [shape = 'u8[4096]{0}', space=vmem, size = 0x1000, scoped, tag = 'output window, operand 0, single buffered']
    %10 = vsyncpa [#allocation3], 0
    %11 = vsyncpa [#allocation6], 0
    %12 = vsyncpa [#allocation9], 0
    %13 = vsyncpa [#allocation4], 0
    // Predicated region
    $region2: #{tpu_custom_call.1} parent=1 // pred_check
      _
    $region3: #{tpu_custom_call.1} parent=1 // pred_check_branch
      %15 = sbr.rel (0) target = $region5
    $region4: #{tpu_custom_call.1} parent=1 // pred_region
      %17 = vsyncadd [#allocation3], 0
      %s19 = sshll.u32 %s0, 4
      %s20 = int_to_ptr.hbm [resolvable:$true] %s19
      %s21 = sshll.u32 [#allocation2], 4
      %s22 = int_to_ptr.vmem [resolvable:$true] %s21
      %24 = dma.hbm_to_vmem [thread:$0]  %s20, 128, %s22, [#allocation3]
    $region5: #{tpu_custom_call.1} parent=1 // pred_fallthru
      _
    // Predicated region
    $region6: #{tpu_custom_call.1} parent=1 // pred_check
      _
    $region7: #{tpu_custom_call.1} parent=1 // pred_check_branch
      %26 = sbr.rel (0) target = $region9
    $region8: #{tpu_custom_call.1} parent=1 // pred_region
      %28 = vsyncadd [#allocation6], 0
      %s29 = sshll.u32 %s1, 4
      %s30 = int_to_ptr.hbm [resolvable:$true] %s29
      %s31 = sshll.u32 [#allocation5], 4
      %s32 = int_to_ptr.vmem [resolvable:$true] %s31
      %37 = dma.hbm_to_vmem [thread:$0]  %s30, 256, %s32, [#allocation6], 128, 128, 8
    $region9: #{tpu_custom_call.1} parent=1 // pred_fallthru
      _
    // Predicated region
    $region10: #{tpu_custom_call.1} parent=1 // pred_check
      _
    $region11: #{tpu_custom_call.1} parent=1 // pred_check_branch
      %39 = sbr.rel (0) target = $region13
    $region12: #{tpu_custom_call.1} parent=1 // pred_region
      %41 = vsyncadd [#allocation6], 0
      %s42 = sshll.u32 %s2, 4
      %s43 = int_to_ptr.hbm [resolvable:$true] %s42
      %s44 = sshll.u32 [#allocation7], 4
      %s45 = int_to_ptr.vmem [resolvable:$true] %s44
      %50 = dma.hbm_to_vmem [thread:$0]  %s43, 512, %s45, [#allocation6], 128, 128, 8
    $region13: #{tpu_custom_call.1} parent=1 // pred_fallthru
      _
    // Predicated region
    $region14: #{tpu_custom_call.1} parent=1 // pred_check
      _
    $region15: #{tpu_custom_call.1} parent=1 // pred_check_branch
      %52 = sbr.rel (0) target = $region17
    $region16: #{tpu_custom_call.1} parent=1 // pred_region
      %54 = vsyncadd [#allocation9], 0
      %s55 = sshll.u32 %s3, 4
      %s56 = int_to_ptr.hbm [resolvable:$true] %s55
      %s57 = sshll.u32 [#allocation8], 4
      %s58 = int_to_ptr.vmem [resolvable:$true] %s57
      %63 = dma.hbm_to_vmem [thread:$0]  %s56, 512, %s58, [#allocation9], 128, 128, 8
    $region17: #{tpu_custom_call.1} parent=1 // pred_fallthru
      _
    // Predicated region
    $region18: #{tpu_custom_call.1} parent=1 // pred_check
      _
    $region19: #{tpu_custom_call.1} parent=1 // pred_check_branch
      %65 = sbr.rel (0) target = $region21
    $region20: #{tpu_custom_call.1} parent=1 // pred_region
      %67 = vsyncadd [#allocation9], 0
      %s69 = sshll.u32 %s4, 4
      %s70 = int_to_ptr.hbm [resolvable:$true] %s69
      %s71 = sshll.u32 [#allocation10], 4
      %s72 = int_to_ptr.vmem [resolvable:$true] %s71
      %74 = dma.hbm_to_vmem [thread:$0]  %s70, 128, %s72, [#allocation9]
    $region21: #{tpu_custom_call.1} parent=1 // pred_fallthru
      _
    // Predicated region
    $region22: #{tpu_custom_call.1} parent=1 // pred_check
      _
    $region23: #{tpu_custom_call.1} parent=1 // pred_check_branch
      %76 = sbr.rel (0) target = $region25
    $region24: #{tpu_custom_call.1} parent=1 // pred_region
      %78 = dma.done [#allocation3], 128
    $region25: #{tpu_custom_call.1} parent=1 // pred_fallthru
      _
    // Predicated region
    $region26: #{tpu_custom_call.1} parent=1 // pred_check
      _
    $region27: #{tpu_custom_call.1} parent=1 // pred_check_branch
      %80 = sbr.rel (0) target = $region29
    $region28: #{tpu_custom_call.1} parent=1 // pred_region
      %82 = dma.done [#allocation6], 256
    $region29: #{tpu_custom_call.1} parent=1 // pred_fallthru
      _
    // Predicated region
    $region30: #{tpu_custom_call.1} parent=1 // pred_check
      _
    $region31: #{tpu_custom_call.1} parent=1 // pred_check_branch
      %84 = sbr.rel (0) target = $region33
    $region32: #{tpu_custom_call.1} parent=1 // pred_region
      %86 = dma.done [#allocation6], 512
    $region33: #{tpu_custom_call.1} parent=1 // pred_fallthru
      _
    // Predicated region
    $region34: #{tpu_custom_call.1} parent=1 // pred_check
      _
    $region35: #{tpu_custom_call.1} parent=1 // pred_check_branch
      %88 = sbr.rel (0) target = $region37
    $region36: #{tpu_custom_call.1} parent=1 // pred_region
      %90 = dma.done [#allocation9], 512
    $region37: #{tpu_custom_call.1} parent=1 // pred_fallthru
      _
    // Predicated region
    $region38: #{tpu_custom_call.1} parent=1 // pred_check
      _
    $region39: #{tpu_custom_call.1} parent=1 // pred_check_branch
      %92 = sbr.rel (0) target = $region41
    $region40: #{tpu_custom_call.1} parent=1 // pred_region
      %94 = dma.done [#allocation9], 128
    $region41: #{tpu_custom_call.1} parent=1 // pred_fallthru
      _
    %v95 = vld [vmem:[#allocation2] sm:$0xff]
    %v96 = vld [vmem:[#allocation10] sm:$0x1]
    %v97 = vld [vmem:[#allocation10 + $0x1] sm:$0x1]
    %v98 = vld [vmem:[#allocation10 + $0x2] sm:$0x1]
    %v99 = vld [vmem:[#allocation10 + $0x3] sm:$0x1]
    %v100 = vld [vmem:[#allocation10 + $0x4] sm:$0x1]
    %v101 = vld [vmem:[#allocation5] sm:$0xff]
    %v102 = vld [vmem:[#allocation5 + $0x8] sm:$0xff]
    %vm103 = vcmask 130048
    %v105 = vsel %vm103, %v95, 0
    %107 = vmatpush.msra.mxu0 0.0
    %108 = vmatpush.msra.mxu0 0.0
    %109 = vmatpush.msra.mxu0 0.0
    %110 = vmatpush.msra.mxu0 0.0
    %111 = vmatpush.msra.mxu0 0.0
    %112 = vmatpush.msra.mxu0 0.0
    %113 = vmatpush.msra.mxu0 0.0
    %114 = vmatpush.msra.mxu0 0.0
    %115 = vmatpush.msra.mxu0 0.0
    %116 = vmatpush.msra.mxu0 0.0
    %117 = vmatpush.msra.mxu0 0.0
    %118 = vmatpush.msra.mxu0 0.0
    %119 = vmatpush.msra.mxu0 0.0
    %120 = vmatpush.msra.mxu0 0.0
    %121 = vmatpush.msra.mxu0 %v102
    %122 = vmatpush.msra.mxu0 %v101
    %123 = vmatmul.f32.gmra.mxu0 %v105
    %v124 = vpop.f32.mrf.mxu0
    %v125 = vadd.f32 0.0, %v124
    %126 = vdwg.mxu0
    %vm127 = vcmask 261120
    %v128 = vsel %vm127, %v125, 0.0
    %v129 = vrot.slane %v128, 4
    %v130 = vadd.f32 %v128, %v129
    %v131 = vrot.slane %v130, 2
    %v132 = vadd.f32 %v130, %v131
    %v133 = vrot.slane %v132, 1
    %v134 = vadd.f32 %v132, %v133
    %v135 = vmul.f32 %v134, 0.125
    %v136 = vsub.f32 %v125, %v135
    %v137 = vmul.f32 %v136, %v136
    %v138 = vsel %vm127, %v137, 0.0
    %v139 = vrot.slane %v138, 4
    %v140 = vadd.f32 %v138, %v139
    %v141 = vrot.slane %v140, 2
    %v142 = vadd.f32 %v140, %v141
    %v143 = vrot.slane %v142, 1
    %v144 = vadd.f32 %v142, %v143
    %v145 = vmul.f32 %v144, 0.125
    %v146 = vadd.f32 %v145, 1e-05
    %v147 = vrsqrt.pop %v146
    %v148 = vmul.f32 %v147, %v146
    %v149 = vmul.f32 %v148, %v147
    %v150 = vmul.f32 0.5, %v149
    %v151 = vsub.f32 1.5, %v150
    %v152 = vmul.f32 %v147, %v151
    %vm153 = vweird.f32 %v146
    %vm154 = vweird.f32 %v147
    %vm155 = vmor %vm153, %vm154
    %v156 = vsel %vm155, %v147, %v152
    %v157 = vmul.f32 %v96, %v156
    %v158 = vperm.slane %v157, 0
    %v159 = vmul.f32 %v136, %v158
    %v160 = vperm.slane %v97, 0
    %v161 = vadd.f32 %v159, %v160
    %v162 = vmax.f32 %v161, 0.0
    %v163 = vld [vmem:[#allocation7] sm:$0xff]
    %v164 = vld [vmem:[#allocation7 + $0x8] sm:$0xff]
    %v165 = vld [vmem:[#allocation7 + $0x10] sm:$0xff]
    %v166 = vld [vmem:[#allocation7 + $0x18] sm:$0xff]
    %v168 = vsel %vm127, %v162, 0
    %170 = vmatpush.msra.mxu0 0.0
    %171 = vmatpush.msra.mxu0 0.0
    %172 = vmatpush.msra.mxu0 0.0
    %173 = vmatpush.msra.mxu0 0.0
    %174 = vmatpush.msra.mxu0 0.0
    %175 = vmatpush.msra.mxu0 0.0
    %176 = vmatpush.msra.mxu0 0.0
    %177 = vmatpush.msra.mxu0 0.0
    %178 = vmatpush.msra.mxu0 0.0
    %179 = vmatpush.msra.mxu0 0.0
    %180 = vmatpush.msra.mxu0 0.0
    %181 = vmatpush.msra.mxu0 0.0
    %182 = vmatpush.msra.mxu0 %v166
    %183 = vmatpush.msra.mxu0 %v165
    %184 = vmatpush.msra.mxu0 %v164
    %185 = vmatpush.msra.mxu0 %v163
    %186 = vmatmul.f32.gmra.mxu0 %v168
    %v187 = vpop.f32.mrf.mxu0
    %v188 = vadd.f32 0.0, %v187
    %189 = vdwg.mxu0
    %v190 = vsel %vm127, %v188, 0.0
    %v191 = vrot.slane %v190, 4
    %v192 = vadd.f32 %v190, %v191
    %v193 = vrot.slane %v192, 2
    %v194 = vadd.f32 %v192, %v193
    %v195 = vrot.slane %v194, 1
    %v196 = vadd.f32 %v194, %v195
    %v197 = vmul.f32 %v196, 0.125
    %v198 = vsub.f32 %v188, %v197
    %v199 = vmul.f32 %v198, %v198
    %v200 = vsel %vm127, %v199, 0.0
    %v201 = vrot.slane %v200, 4
    %v202 = vadd.f32 %v200, %v201
    %v203 = vrot.slane %v202, 2
    %v204 = vadd.f32 %v202, %v203
    %v205 = vrot.slane %v204, 1
    %v206 = vadd.f32 %v204, %v205
    %v207 = vmul.f32 %v206, 0.125
    %v208 = vadd.f32 %v207, 1e-05
    %v209 = vrsqrt.pop %v208
    %v210 = vmul.f32 %v209, %v208
    %v211 = vmul.f32 %v210, %v209
    %v212 = vmul.f32 0.5, %v211
    %v213 = vsub.f32 1.5, %v212
    %v214 = vmul.f32 %v209, %v213
    %vm215 = vweird.f32 %v208
    %vm216 = vweird.f32 %v209
    %vm217 = vmor %vm215, %vm216
    %v218 = vsel %vm217, %v209, %v214
    %v219 = vmul.f32 %v98, %v218
    %v220 = vperm.slane %v219, 0
    %v221 = vmul.f32 %v198, %v220
    %v222 = vperm.slane %v99, 0
    %v223 = vadd.f32 %v221, %v222
    %v224 = vmax.f32 %v223, 0.0
    %v225 = vld [vmem:[#allocation8] sm:$0xff]
    %v226 = vld [vmem:[#allocation8 + $0x8] sm:$0xff]
    %v227 = vld [vmem:[#allocation8 + $0x10] sm:$0xff]
    %v228 = vld [vmem:[#allocation8 + $0x18] sm:$0xff]
    %v229 = vperm.slane %v100, 0
    %v231 = vsel %vm127, %v224, 0
    %233 = vmatpush.msra.mxu0 0.0
    %234 = vmatpush.msra.mxu0 0.0
    %235 = vmatpush.msra.mxu0 0.0
    %236 = vmatpush.msra.mxu0 0.0
    %237 = vmatpush.msra.mxu0 0.0
    %238 = vmatpush.msra.mxu0 0.0
    %239 = vmatpush.msra.mxu0 0.0
    %240 = vmatpush.msra.mxu0 0.0
    %241 = vmatpush.msra.mxu0 0.0
    %242 = vmatpush.msra.mxu0 0.0
    %243 = vmatpush.msra.mxu0 0.0
    %244 = vmatpush.msra.mxu0 0.0
    %245 = vmatpush.msra.mxu0 %v228
    %246 = vmatpush.msra.mxu0 %v227
    %247 = vmatpush.msra.mxu0 %v226
    %248 = vmatpush.msra.mxu0 %v225
    %249 = vmatmul.f32.gmra.mxu0 %v231
    %v250 = vpop.f32.mrf.mxu0
    %v251 = vadd.f32 %v229, %v250
    %252 = vdwg.mxu0
    %253 = vst [vmem:[#allocation11] sm:$0xff] %v251
    // Predicated region
    $region42: #{tpu_custom_call.1} parent=1 // pred_check
      _
    $region43: #{tpu_custom_call.1} parent=1 // pred_check_branch
      %255 = sbr.rel (0) target = $region45
    $region44: #{tpu_custom_call.1} parent=1 // pred_region
      %257 = vsyncadd [#allocation4], 0
      %s259 = sshll.u32 [#allocation11], 4
      %s260 = int_to_ptr.vmem [resolvable:$true] %s259
      %s261 = sshll.u32 %s5, 4
      %s262 = int_to_ptr.hbm [resolvable:$true] %s261
      %264 = dma.vmem_to_hbm [thread:$0]  %s260, 128, %s262, [#allocation4]
    $region45: #{tpu_custom_call.1} parent=1 // pred_fallthru
      _
    // Predicated region
    $region46: #{tpu_custom_call.1} parent=1 // pred_check
      _
    $region47: #{tpu_custom_call.1} parent=1 // pred_check_branch
      %266 = sbr.rel (0) target = $region49
    $region48: #{tpu_custom_call.1} parent=1 // pred_region
      %268 = dma.done [#allocation4], 128
    $region49: #{tpu_custom_call.1} parent=1 // pred_fallthru
      _
    %269 = vsyncpa [#allocation3], 1
    %270 = vsyncpa [#allocation6], 1
    %271 = vsyncpa [#allocation9], 1
    %272 = vsyncpa [#allocation4], 1

</llo_original>
